<compile_context>
chip_gen: v7x
topology: tpu7x:2x2x1
jax: 0.10.0
libtpu: 0.0.40
codegen_flags: <defaults>
</compile_context>

<pallas_src>
import jax
import jax.numpy as jnp
from jax import lax
from jax.experimental import pallas as pl
from jax.experimental.pallas import tpu as pltpu

LN_EPS = 1e-5
# Raised scoped-VMEM budget: > v5e's 16 MiB / v6e's 32 MiB defaults, < v7x's
# 64 MiB physical per-TC VMEM.
_VMEM_LIMIT_BYTES = 48 * 1024 * 1024


# ------------------------------- small helpers -------------------------------
def _prod(xs):
    r = 1
    for s in xs:
        r *= s
    return r


def _round_up(x, m):
    return (x + m - 1) // m * m


def _pick_tile(n, target, align):
    """Largest multiple of `align` that divides n and is <= target, else n."""
    if n <= target:
        return n
    t = (target // align) * align
    while t >= align:
        if n % t == 0:
            return t
        t -= align
    return n


def _row_stats(x):
    """One-pass mean / rsqrt(var + eps) over the last axis (f32 in/out)."""
    dim = x.shape[-1]
    s = jnp.sum(x, axis=-1, keepdims=True)
    sq = jnp.sum(x * x, axis=-1, keepdims=True)
    mean = s * (1.0 / dim)
    var = jnp.maximum(sq * (1.0 / dim) - mean * mean, 0.0)  # clamp fp jitter
    return mean, lax.rsqrt(var + LN_EPS)


# ----------------------------- LayerNorm kernel -------------------------------
def _layernorm_kernel(x_ref, gamma_ref, beta_ref, o_ref):
    x = x_ref[...].astype(jnp.float32)                       # (bm, dim)
    mean, inv = _row_stats(x)
    o_ref[...] = ((x - mean) * inv * gamma_ref[...] + beta_ref[...]).astype(o_ref.dtype)


def layer_norm(x, gamma, beta, *, block_rows=512):
    """LayerNorm over the last axis of x (any leading shape)."""
    orig_shape = x.shape
    dim = orig_shape[-1]
    rows = _prod(orig_shape[:-1])
    x2 = x.reshape(rows, dim)
    g2 = gamma.reshape(1, dim).astype(jnp.float32)
    b2 = beta.reshape(1, dim).astype(jnp.float32)

    bm = min(block_rows, _round_up(rows, 8))
    rows_pad = _round_up(rows, bm)
    if rows_pad != rows:
        x2 = jnp.pad(x2, ((0, rows_pad - rows), (0, 0)))

    out = pl.pallas_call(
        _layernorm_kernel,
        out_shape=jax.ShapeDtypeStruct((rows_pad, dim), x.dtype),
        grid_spec=pltpu.PrefetchScalarGridSpec(
            num_scalar_prefetch=0,
            grid=(rows_pad // bm,),
            in_specs=[
                pl.BlockSpec((bm, dim), lambda i: (i, 0)),
                pl.BlockSpec((1, dim), lambda i: (0, 0)),
                pl.BlockSpec((1, dim), lambda i: (0, 0)),
            ],
            out_specs=pl.BlockSpec((bm, dim), lambda i: (i, 0)),
        ),
        compiler_params=pltpu.CompilerParams(
            dimension_semantics=("parallel",),
            vmem_limit_bytes=_VMEM_LIMIT_BYTES),
    )(x2, g2, b2)
    if rows_pad != rows:
        out = out[:rows]
    return out.reshape(orig_shape)


# --------------------- fused pre-norm + Linear sublayer -----------------------
def _prenorm_linear_kernel(x_ref, gamma_ref, beta_ref, w_ref, b_ref, o_ref):
    x = x_ref[...].astype(jnp.float32)                       # (tm, K) full K
    mean, inv = _row_stats(x)
    xn = (x - mean) * inv * gamma_ref[...] + beta_ref[...]
    acc = jnp.dot(xn.astype(w_ref.dtype), w_ref[...],
                  preferred_element_type=jnp.float32)
    o_ref[...] = (acc + b_ref[...]).astype(o_ref.dtype)


def prenorm_linear(x, gamma, beta, w, bias, *, block_m=256, block_n=256):
    """LayerNorm(x) @ w + bias, with the LN fused into the matmul LHS tile."""
    orig_shape = x.shape
    K = orig_shape[-1]
    N = w.shape[1]
    rows = _prod(orig_shape[:-1])
    x2 = x.reshape(rows, K)
    g2 = gamma.reshape(1, K).astype(jnp.float32)
    be2 = beta.reshape(1, K).astype(jnp.float32)
    b2 = bias.reshape(1, N).astype(jnp.float32)

    # Halve the M-tile for large K so double-buffered tiles fit v7x's 64 MiB VMEM.
    tm = min(block_m if K <= 4096 else block_m // 2, _round_up(rows, 8))
    tn = N if N <= 1024 else _pick_tile(N, block_n, 128)
    rows_pad = _round_up(rows, tm)
    if rows_pad != rows:
        x2 = jnp.pad(x2, ((0, rows_pad - rows), (0, 0)))

    out = pl.pallas_call(
        _prenorm_linear_kernel,
        out_shape=jax.ShapeDtypeStruct((rows_pad, N), x.dtype),
        grid_spec=pltpu.PrefetchScalarGridSpec(
            num_scalar_prefetch=0,
            grid=(rows_pad // tm, N // tn),
            in_specs=[
                pl.BlockSpec((tm, K), lambda i, j: (i, 0)),
                pl.BlockSpec((1, K), lambda i, j: (0, 0)),
                pl.BlockSpec((1, K), lambda i, j: (0, 0)),
                pl.BlockSpec((K, tn), lambda i, j: (0, j)),
                pl.BlockSpec((1, tn), lambda i, j: (0, j)),
            ],
            out_specs=pl.BlockSpec((tm, tn), lambda i, j: (i, j)),
        ),
        compiler_params=pltpu.CompilerParams(
            dimension_semantics=("parallel", "parallel"),
            vmem_limit_bytes=_VMEM_LIMIT_BYTES),
        cost_estimate=pl.CostEstimate(
            flops=2 * rows_pad * N * K + 10 * rows_pad * K,
            transcendentals=rows_pad,
            bytes_accessed=4 * (rows_pad * K * max(N // tn, 1) + K * N + rows_pad * N)),
    )(x2, g2, be2, w, b2)
    if rows_pad != rows:
        out = out[:rows]
    return out.reshape(orig_shape[:-1] + (N,))


# --------------------- fused Linear sublayer + post-norm ----------------------
def _linear_postnorm_kernel(x_ref, w_ref, b_ref, gamma_ref, beta_ref, o_ref, acc_ref):
    k = pl.program_id(1)

    @pl.when(k == 0)
    def _():
        acc_ref[...] = jnp.zeros_like(acc_ref)

    acc_ref[...] += jnp.dot(x_ref[...], w_ref[...],
                            preferred_element_type=jnp.float32)

    @pl.when(k == pl.num_programs(1) - 1)
    def _():
        y = acc_ref[...] + b_ref[...]                        # (tm, N) full N
        mean, inv = _row_stats(y)
        o_ref[...] = ((y - mean) * inv * gamma_ref[...] + beta_ref[...]).astype(o_ref.dtype)


def linear_postnorm(x, w, bias, gamma, beta, *, block_m=256, block_k=512):
    """LayerNorm(x @ w + bias), LN applied in the k==last epilogue."""
    orig_shape = x.shape
    K = orig_shape[-1]
    N = w.shape[1]
    rows = _prod(orig_shape[:-1])
    x2 = x.reshape(rows, K)
    b2 = bias.reshape(1, N).astype(jnp.float32)
    g2 = gamma.reshape(1, N).astype(jnp.float32)
    be2 = beta.reshape(1, N).astype(jnp.float32)

    tm = min(block_m if N <= 4096 else block_m // 2, _round_up(rows, 8))
    tk = K if K <= 1024 else _pick_tile(K, block_k, 128)
    rows_pad = _round_up(rows, tm)
    if rows_pad != rows:
        x2 = jnp.pad(x2, ((0, rows_pad - rows), (0, 0)))

    out = pl.pallas_call(
        _linear_postnorm_kernel,
        out_shape=jax.ShapeDtypeStruct((rows_pad, N), x.dtype),
        grid_spec=pltpu.PrefetchScalarGridSpec(
            num_scalar_prefetch=0,
            grid=(rows_pad // tm, K // tk),
            in_specs=[
                pl.BlockSpec((tm, tk), lambda i, k: (i, k)),
                pl.BlockSpec((tk, N), lambda i, k: (k, 0)),
                pl.BlockSpec((1, N), lambda i, k: (0, 0)),
                pl.BlockSpec((1, N), lambda i, k: (0, 0)),
                pl.BlockSpec((1, N), lambda i, k: (0, 0)),
            ],
            out_specs=pl.BlockSpec((tm, N), lambda i, k: (i, 0)),
            scratch_shapes=[pltpu.VMEM((tm, N), jnp.float32)],
        ),
        compiler_params=pltpu.CompilerParams(
            dimension_semantics=("parallel", "arbitrary"),
            vmem_limit_bytes=_VMEM_LIMIT_BYTES),
        cost_estimate=pl.CostEstimate(
            flops=2 * rows_pad * N * K + 10 * rows_pad * N,
            transcendentals=rows_pad,
            bytes_accessed=4 * (rows_pad * K + K * N + rows_pad * N)),
    )(x2, w, b2, g2, be2)
    if rows_pad != rows:
        out = out[:rows]
    return out.reshape(orig_shape[:-1] + (N,))


# ------------------------ plain tiled Linear sublayer -------------------------
def _linear_kernel(x_ref, w_ref, b_ref, o_ref, acc_ref):
    k = pl.program_id(2)

    @pl.when(k == 0)
    def _():
        acc_ref[...] = jnp.zeros_like(acc_ref)

    acc_ref[...] += jnp.dot(x_ref[...], w_ref[...],
                            preferred_element_type=jnp.float32)

    @pl.when(k == pl.num_programs(2) - 1)
    def _():
        o_ref[...] = (acc_ref[...] + b_ref[...]).astype(o_ref.dtype)


def linear(x, w, bias, *, block_m=256, block_n=256, block_k=512):
    """x: (..., K) @ w: (K, N) + bias: (N,), tiled with f32 accumulator."""
    orig_shape = x.shape
    K = orig_shape[-1]
    N = w.shape[1]
    rows = _prod(orig_shape[:-1])
    x2 = x.reshape(rows, K)
    b2 = bias.reshape(1, N).astype(jnp.float32)

    tm = min(block_m, _round_up(rows, 8))
    tn = N if N <= 1024 else _pick_tile(N, block_n, 128)
    tk = K if K <= 1024 else _pick_tile(K, block_k, 128)
    rows_pad = _round_up(rows, tm)
    if rows_pad != rows:
        x2 = jnp.pad(x2, ((0, rows_pad - rows), (0, 0)))

    out = pl.pallas_call(
        _linear_kernel,
        out_shape=jax.ShapeDtypeStruct((rows_pad, N), x.dtype),
        grid_spec=pltpu.PrefetchScalarGridSpec(
            num_scalar_prefetch=0,
            grid=(rows_pad // tm, N // tn, K // tk),
            in_specs=[
                pl.BlockSpec((tm, tk), lambda i, j, k: (i, k)),
                pl.BlockSpec((tk, tn), lambda i, j, k: (k, j)),
                pl.BlockSpec((1, tn), lambda i, j, k: (0, j)),
            ],
            out_specs=pl.BlockSpec((tm, tn), lambda i, j, k: (i, j)),
            scratch_shapes=[pltpu.VMEM((tm, tn), jnp.float32)],
        ),
        compiler_params=pltpu.CompilerParams(
            dimension_semantics=("parallel", "parallel", "arbitrary"),
            vmem_limit_bytes=_VMEM_LIMIT_BYTES),
    )(x2, w, b2)
    if rows_pad != rows:
        out = out[:rows]
    return out.reshape(orig_shape[:-1] + (N,))


# --------------------------- EncoderLayerNorm wrapper -------------------------
class EncoderLayerNorm:
    """JAX/Pallas port of the PyTorch EncoderLayerNorm wrapper.

    residual_norm_style: "pre" or "post".
    The sublayer is a Linear(dim_model, dim_model) that consumes a *list* of
    inputs (mimicking RequiresWrappedInputs) and operates on inputs[0].
    """

    def __init__(self, dim_model, residual_norm_style, key):
        self.dim_model = dim_model
        self.residual_norm_style = residual_norm_style
        k_g, k_b, k_w, k_bias = jax.random.split(key, 4)
        # FusedLayerNorm(dim_model) params (perturbed so the affine path is exercised).
        self.ln_gamma = jnp.ones((dim_model,), jnp.float32) \
            + 0.05 * jax.random.normal(k_g, (dim_model,), jnp.float32)
        self.ln_beta = 0.05 * jax.random.normal(k_b, (dim_model,), jnp.float32)
        # Stand-in sublayer: Linear(dim_model, dim_model).
        self.w = jax.random.normal(k_w, (dim_model, dim_model), jnp.float32) \
            / jnp.sqrt(jnp.float32(dim_model))
        self.bias = 0.01 * jax.random.normal(k_bias, (dim_model,), jnp.float32)
        self.wrap_inputs = True  # sublayer takes a list of inputs

    def _sublayer(self, inputs):
        return linear(inputs[0], self.w, self.bias)

    def __call__(self, inputs):
        if self.residual_norm_style == "pre":
            if all(x is inputs[0] for x in inputs):
                # Same aliasing optimization as the PyTorch code: normalize once,
                # fused directly into the matmul (no extra HBM round trip).
                return prenorm_linear(inputs[0], self.ln_gamma, self.ln_beta,
                                      self.w, self.bias)
            normed = [layer_norm(x_, self.ln_gamma, self.ln_beta) for x_ in inputs]
            return self._sublayer(normed)
        if self.residual_norm_style == "post":
            return linear_postnorm(inputs[0], self.w, self.bias,
                                   self.ln_gamma, self.ln_beta)
        return self._sublayer(inputs)


# --------------------------------- reference ---------------------------------
def _layer_norm_ref(x, gamma, beta):
    mean = jnp.mean(x, axis=-1, keepdims=True)
    var = jnp.mean((x - mean) ** 2, axis=-1, keepdims=True)
    return (x - mean) * lax.rsqrt(var + LN_EPS) * gamma + beta


def _encoder_ref(mod, inputs):
    x = inputs
    if mod.residual_norm_style == "pre":
        xn = _layer_norm_ref(x[0], mod.ln_gamma, mod.ln_beta)
        x = [xn for _ in x]
    y = jnp.dot(x[0], mod.w, precision=lax.Precision.HIGHEST) + mod.bias
    if mod.residual_norm_style == "post":
        y = _layer_norm_ref(y, mod.ln_gamma, mod.ln_beta)
    return y


if __name__ == "__main__":
    key = jax.random.PRNGKey(0)
    k_x, k_y, k_mod = jax.random.split(key, 3)

    # dim_model is a multiple of 128 so LN/matmul outputs are lane-dense.
    batch, seq, dim_model = 2, 8, 128
    x = jax.random.normal(k_x, (batch, seq, dim_model), jnp.float32)
    y = jax.random.normal(k_y, (batch, seq, dim_model), jnp.float32)

    # Pre-norm, all wrapped inputs alias (q/k/v style) -> fused LN+matmul kernel.
    enc_pre = EncoderLayerNorm(dim_model, "pre", k_mod)
    out_pre = jax.block_until_ready(enc_pre([x, x, x]))
    ref_pre = _encoder_ref(enc_pre, [x, x, x])

    # Pre-norm, distinct wrapped inputs -> standalone LN kernel + tiled linear.
    out_pre2 = jax.block_until_ready(enc_pre([x, y]))
    ref_pre2 = _encoder_ref(enc_pre, [x, y])

    # Post-norm -> tiled matmul with LN fused into the k==last epilogue.
    enc_post = EncoderLayerNorm(dim_model, "post", k_mod)
    out_post = jax.block_until_ready(enc_post([x]))
    ref_post = _encoder_ref(enc_post, [x])

    assert out_pre.shape == (batch, seq, dim_model)
    assert out_post.shape == (batch, seq, dim_model)
    assert jnp.allclose(out_pre, ref_pre, atol=2e-4, rtol=2e-4), \
        float(jnp.max(jnp.abs(out_pre - ref_pre)))
    assert jnp.allclose(out_pre2, ref_pre2, atol=2e-4, rtol=2e-4), \
        float(jnp.max(jnp.abs(out_pre2 - ref_pre2)))
    assert jnp.allclose(out_post, ref_post, atol=2e-4, rtol=2e-4), \
        float(jnp.max(jnp.abs(out_post - ref_post)))

    print("KERNEL_OK")
</pallas_src>

<mosaic_0001>
module attributes {stable_mosaic.version = 11 : i64} {
  func.func @_prenorm_linear_kernel(%arg0: i32, %arg1: i32, %arg2: memref<16x128xf32, #tpu.memory_space<vmem>>, %arg3: memref<1x128xf32, #tpu.memory_space<vmem>>, %arg4: memref<1x128xf32, #tpu.memory_space<vmem>>, %arg5: memref<128x128xf32, #tpu.memory_space<vmem>>, %arg6: memref<1x128xf32, #tpu.memory_space<vmem>>, %arg7: memref<16x128xf32, #tpu.memory_space<vmem>>) attributes {dimension_semantics = [#tpu.dimension_semantics<parallel>, #tpu.dimension_semantics<parallel>], iteration_bounds = array<i64: 1, 1>, scalar_prefetch = 0 : i64, scratch_operands = 0 : i64, tpu.core_type = #tpu.core_type<tc>, window_params = [{transform_indices = @transform_0, window_bounds = array<i64: 16, 128>}, {pipeline_mode = #tpu.pipeline_mode<synchronous>, transform_indices = @transform_1, window_bounds = array<i64: 1, 128>}, {pipeline_mode = #tpu.pipeline_mode<synchronous>, transform_indices = @transform_2, window_bounds = array<i64: 1, 128>}, {transform_indices = @transform_3, window_bounds = array<i64: 128, 128>}, {transform_indices = @transform_4, window_bounds = array<i64: 1, 128>}, {transform_indices = @transform_5, window_bounds = array<i64: 16, 128>}]} {
    %c0 = arith.constant 0 : index
    %c0_0 = arith.constant 0 : index
    %0 = vector.load %arg2[%c0, %c0_0] : memref<16x128xf32, #tpu.memory_space<vmem>>, vector<16x128xf32>
    %cst = arith.constant dense<0.000000e+00> : vector<16xf32>
    %1 = vector.multi_reduction <add>, %0, %cst [1] : vector<16x128xf32> to vector<16xf32>
    %2 = vector.shape_cast %1 : vector<16xf32> to vector<16x1xf32>
    %3 = arith.mulf %0, %0 : vector<16x128xf32>
    %cst_1 = arith.constant dense<0.000000e+00> : vector<16xf32>
    %4 = vector.multi_reduction <add>, %3, %cst_1 [1] : vector<16x128xf32> to vector<16xf32>
    %5 = vector.shape_cast %4 : vector<16xf32> to vector<16x1xf32>
    %cst_2 = arith.constant 7.812500e-03 : f32
    %6 = vector.broadcast %cst_2 : f32 to vector<16x1xf32>
    %7 = arith.mulf %2, %6 : vector<16x1xf32>
    %cst_3 = arith.constant 7.812500e-03 : f32
    %8 = vector.broadcast %cst_3 : f32 to vector<16x1xf32>
    %9 = arith.mulf %5, %8 : vector<16x1xf32>
    %10 = arith.mulf %7, %7 : vector<16x1xf32>
    %11 = arith.subf %9, %10 : vector<16x1xf32>
    %cst_4 = arith.constant 0.000000e+00 : f32
    %12 = vector.broadcast %cst_4 : f32 to vector<16x1xf32>
    %13 = arith.maximumf %11, %12 : vector<16x1xf32>
    %cst_5 = arith.constant 9.99999974E-6 : f32
    %14 = vector.broadcast %cst_5 : f32 to vector<16x1xf32>
    %15 = arith.addf %13, %14 : vector<16x1xf32>
    %16 = math.rsqrt %15 : vector<16x1xf32>
    %17 = vector.broadcast %7 : vector<16x1xf32> to vector<16x128xf32>
    %18 = arith.subf %0, %17 : vector<16x128xf32>
    %19 = vector.broadcast %16 : vector<16x1xf32> to vector<16x128xf32>
    %20 = arith.mulf %18, %19 : vector<16x128xf32>
    %c0_6 = arith.constant 0 : index
    %c0_7 = arith.constant 0 : index
    %21 = vector.load %arg3[%c0_6, %c0_7] : memref<1x128xf32, #tpu.memory_space<vmem>>, vector<1x128xf32>
    %22 = vector.broadcast %21 : vector<1x128xf32> to vector<16x128xf32>
    %23 = arith.mulf %20, %22 : vector<16x128xf32>
    %c0_8 = arith.constant 0 : index
    %c0_9 = arith.constant 0 : index
    %24 = vector.load %arg4[%c0_8, %c0_9] : memref<1x128xf32, #tpu.memory_space<vmem>>, vector<1x128xf32>
    %25 = vector.broadcast %24 : vector<1x128xf32> to vector<16x128xf32>
    %26 = arith.addf %23, %25 : vector<16x128xf32>
    %c0_10 = arith.constant 0 : index
    %c0_11 = arith.constant 0 : index
    %27 = vector.load %arg5[%c0_10, %c0_11] : memref<128x128xf32, #tpu.memory_space<vmem>>, vector<128x128xf32>
    %cst_12 = arith.constant dense<0.000000e+00> : vector<16x128xf32>
    %28 = tpu.matmul %26, %27, %cst_12 {dimension_numbers = #tpu.dot_dimension_numbers<[1], [0], [0], [1], [0, 0, 1, 1], [], []>} : vector<16x128xf32>, vector<128x128xf32>, vector<16x128xf32> -> vector<16x128xf32>
    %c0_13 = arith.constant 0 : index
    %c0_14 = arith.constant 0 : index
    %29 = vector.load %arg6[%c0_13, %c0_14] : memref<1x128xf32, #tpu.memory_space<vmem>>, vector<1x128xf32>
    %30 = vector.broadcast %29 : vector<1x128xf32> to vector<16x128xf32>
    %31 = arith.addf %28, %30 : vector<16x128xf32>
    %c0_15 = arith.constant 0 : index
    %c0_16 = arith.constant 0 : index
    %32 = vector.load %arg7[%c0_15, %c0_16] : memref<16x128xf32, #tpu.memory_space<vmem>>, vector<16x128xf32>
    tpu.vector_store %arg7[%c0_15, %c0_16], %31 {strides = array<i32>} : memref<16x128xf32, #tpu.memory_space<vmem>>, vector<16x128xf32>,
    return
  }
  func.func @transform_0(%arg0: i32, %arg1: i32) -> (i32, i32) {
    %c0_i32 = arith.constant 0 : i32
    %c0_i32_0 = arith.constant 0 : i32
    return %arg0, %c0_i32 : i32, i32
  }
  func.func @transform_1(%arg0: i32, %arg1: i32) -> (i32, i32) {
    %c0_i32 = arith.constant 0 : i32
    %c0_i32_0 = arith.constant 0 : i32
    %c0_i32_1 = arith.constant 0 : i32
    return %c0_i32, %c0_i32_0 : i32, i32
  }
  func.func @transform_2(%arg0: i32, %arg1: i32) -> (i32, i32) {
    %c0_i32 = arith.constant 0 : i32
    %c0_i32_0 = arith.constant 0 : i32
    %c0_i32_1 = arith.constant 0 : i32
    return %c0_i32, %c0_i32_0 : i32, i32
  }
  func.func @transform_3(%arg0: i32, %arg1: i32) -> (i32, i32) {
    %c0_i32 = arith.constant 0 : i32
    %c0_i32_0 = arith.constant 0 : i32
    return %c0_i32, %arg1 : i32, i32
  }
  func.func @transform_4(%arg0: i32, %arg1: i32) -> (i32, i32) {
    %c0_i32 = arith.constant 0 : i32
    %c0_i32_0 = arith.constant 0 : i32
    return %c0_i32, %arg1 : i32, i32
  }
  func.func @transform_5(%arg0: i32, %arg1: i32) -> (i32, i32) {
    %c0_i32 = arith.constant 0 : i32
    return %arg0, %arg1 : i32, i32
  }
}

</mosaic_0001>

<llo_original>
// kernel: tpu_custom_call.1
$region0: #{tpu_custom_call.1}
  #allocation0 [shape = 'u32[]', space=smem, size = 0x4, offset = 0x4, fixed_abs, tag = 'smem constant byte address 0x4 - core index']
  #allocation1 [shape = 'u32[144,128]{1,0:T(1,128)}', space=vmem, size = 0x12000, scoped, tag = 'internal scratch']
  %s0 = inlined_call_operand.hbm [shape: f32[16,128], index: 0, kind: input, shape index: {}]
  %s1 = inlined_call_operand.vmem [shape: f32[1,128], index: 1, kind: input, shape index: {}]
  %s2 = inlined_call_operand.vmem [shape: f32[1,128], index: 2, kind: input, shape index: {}]
  %s3 = inlined_call_operand.hbm [shape: f32[128,128], index: 3, kind: input, shape index: {}]
  %s4 = inlined_call_operand.vmem [shape: f32[1,128], index: 4, kind: input, shape index: {}]
  %s5 = inlined_call_operand.hbm [shape: f32[16,128], index: 5, kind: output, shape index: {}]
  %s6 = sld [smem:[#allocation0]]
  $region38: #{tpu_custom_call.1} parent=0
    _
  %s8 = ssub.s32 1, %s6
  %s9 = scalar_select 0, %s8, %s6
  $region1: #{tpu_custom_call.1} parent=0
    #allocation2 [shape = 'u8[8192]{0}', space=vmem, size = 0x2000, scoped, tag = 'input window, operand 0, single buffered']
    #allocation3 [shape = 's32[1]{0}', space=sflag, size = 0x4, scoped, tag = 'scoped memory for tpu_custom_call.1']
    #allocation4 [shape = 's32[1]{0}', space=sflag, size = 0x4, scoped, tag = 'scoped memory for tpu_custom_call.1']
    #allocation5 [shape = 'u8[65536]{0}', space=vmem, size = 0x10000, scoped, tag = 'input window, operand 3, single buffered']
    #allocation6 [shape = 's32[1]{0}', space=sflag, size = 0x4, scoped, tag = 'scoped memory for tpu_custom_call.1']
    #allocation7 [shape = 'u8[8192]{0}', space=vmem, size = 0x2000, scoped, tag = 'output window, operand 0, single buffered']
    %10 = vsyncpa [#allocation3], 0
    %11 = vsyncpa [#allocation6], 0
    %12 = vsyncpa [#allocation4], 0
    // Predicated region
    $region2: #{tpu_custom_call.1} parent=1 // pred_check
      _
    $region3: #{tpu_custom_call.1} parent=1 // pred_check_branch
      %14 = sbr.rel (0) target = $region5
    $region4: #{tpu_custom_call.1} parent=1 // pred_region
      %s16 = ssub.s32 256, 256
      %17 = vsyncadd [#allocation3], %s16
      %s18 = sshll.u32 [#allocation2], 4
      %s19 = int_to_ptr.vmem [resolvable:$true] %s18
      %24 = dma.hbm_to_vmem [thread:$0]  %s0, 256, %s19, [#allocation3], 128, 128, 8
    $region5: #{tpu_custom_call.1} parent=1 // pred_fallthru
      _
    // Predicated region
    $region6: #{tpu_custom_call.1} parent=1 // pred_check
      _
    $region7: #{tpu_custom_call.1} parent=1 // pred_check_branch
      %26 = sbr.rel (0) target = $region9
    $region8: #{tpu_custom_call.1} parent=1 // pred_region
      _
    $region9: #{tpu_custom_call.1} parent=1 // pred_fallthru
      _
    // Predicated region
    $region10: #{tpu_custom_call.1} parent=1 // pred_check
      _
    $region11: #{tpu_custom_call.1} parent=1 // pred_check_branch
      %28 = sbr.rel (0) target = $region13
    $region12: #{tpu_custom_call.1} parent=1 // pred_region
      _
    $region13: #{tpu_custom_call.1} parent=1 // pred_fallthru
      _
    // Predicated region
    $region14: #{tpu_custom_call.1} parent=1 // pred_check
      _
    $region15: #{tpu_custom_call.1} parent=1 // pred_check_branch
      %30 = sbr.rel (0) target = $region17
    $region16: #{tpu_custom_call.1} parent=1 // pred_region
      %s32 = ssub.s32 2048, 2048
      %33 = vsyncadd [#allocation6], %s32
      %s34 = sshll.u32 [#allocation5], 4
      %s35 = int_to_ptr.vmem [resolvable:$true] %s34
      %40 = dma.hbm_to_vmem [thread:$0]  %s3, 2048, %s35, [#allocation6], 128, 128, 8
    $region17: #{tpu_custom_call.1} parent=1 // pred_fallthru
      _
    // Predicated region
    $region18: #{tpu_custom_call.1} parent=1 // pred_check
      _
    $region19: #{tpu_custom_call.1} parent=1 // pred_check_branch
      %42 = sbr.rel (0) target = $region21
    $region20: #{tpu_custom_call.1} parent=1 // pred_region
      _
    $region21: #{tpu_custom_call.1} parent=1 // pred_fallthru
      _
    // Predicated region
    $region22: #{tpu_custom_call.1} parent=1 // pred_check
      _
    $region23: #{tpu_custom_call.1} parent=1 // pred_check_branch
      %44 = sbr.rel (0) target = $region25
    $region24: #{tpu_custom_call.1} parent=1 // pred_region
      %45 = dma.done [#allocation3], 256
    $region25: #{tpu_custom_call.1} parent=1 // pred_fallthru
      _
    // Predicated region
    $region26: #{tpu_custom_call.1} parent=1 // pred_check
      _
    $region27: #{tpu_custom_call.1} parent=1 // pred_check_branch
      %47 = sbr.rel (0) target = $region29
    $region28: #{tpu_custom_call.1} parent=1 // pred_region
      %48 = dma.done [#allocation6], 2048
    $region29: #{tpu_custom_call.1} parent=1 // pred_fallthru
      _
    %v49 = vld [vmem:[#allocation2] sm:$0xff]
    %v50 = vld [vmem:[#allocation2 + $0x8] sm:$0xff]
    %51 = vadd.xlane.f32.xlu0 %v49
    %v52 = vpop.xlane.xlu0 %51
    %53 = vadd.xlane.f32.xlu0 %v50
    %v54 = vpop.xlane.xlu0 %53
    %v55 = vmul.f32 %v49, %v49
    %v56 = vmul.f32 %v50, %v50
    %57 = vadd.xlane.f32.xlu0 %v55
    %v58 = vpop.xlane.xlu0 %57
    %59 = vadd.xlane.f32.xlu0 %v56
    %v60 = vpop.xlane.xlu0 %59
    %v61 = vmul.f32 %v52, 0.0078125
    %v62 = vmul.f32 %v54, 0.0078125
    %v63 = vmul.f32 %v58, 0.0078125
    %v64 = vmul.f32 %v60, 0.0078125
    %v65 = vmul.f32 %v61, %v61
    %v66 = vmul.f32 %v62, %v62
    %v67 = vsub.f32 %v63, %v65
    %v68 = vsub.f32 %v64, %v66
    %v69 = vmax.f32 %v67, 0.0
    %v70 = vmax.f32 %v68, 0.0
    %v71 = vadd.f32 %v69, 1e-05
    %v72 = vadd.f32 %v70, 1e-05
    %v73 = vrsqrt.pop %v71
    %v74 = vrsqrt.pop %v72
    %v75 = vsub.f32 %v49, %v61
    %v76 = vsub.f32 %v50, %v62
    %v77 = vmul.f32 %v75, %v73
    %v78 = vmul.f32 %v76, %v74
    %v79 = vld [vmem:[%s1] sm:$0x1]
    %v81 = vlaneseq
    %v82 = vshrl.u32 %v81, 7
    %v83 = vsub.s32 0, %v82
    %v84 = vrot.slane %v79, %v83
    %v86 = vmul.f32 %v77, %v84
    %v87 = vmul.f32 %v78, %v84
    %v88 = vld [vmem:[%s2] sm:$0x1]
    %v90 = vlaneseq
    %v91 = vshrl.u32 %v90, 7
    %v92 = vsub.s32 0, %v91
    %v93 = vrot.slane %v88, %v92
    %v95 = vadd.f32 %v86, %v93
    %v96 = vadd.f32 %v87, %v93
    %v97 = vld [vmem:[#allocation5] sm:$0xff]
    %v98 = vld [vmem:[#allocation5 + $0x8] sm:$0xff]
    %v99 = vld [vmem:[#allocation5 + $0x10] sm:$0xff]
    %v100 = vld [vmem:[#allocation5 + $0x18] sm:$0xff]
    %v101 = vld [vmem:[#allocation5 + $0x20] sm:$0xff]
    %v102 = vld [vmem:[#allocation5 + $0x28] sm:$0xff]
    %v103 = vld [vmem:[#allocation5 + $0x30] sm:$0xff]
    %v104 = vld [vmem:[#allocation5 + $0x38] sm:$0xff]
    %v105 = vld [vmem:[#allocation5 + $0x40] sm:$0xff]
    %v106 = vld [vmem:[#allocation5 + $0x48] sm:$0xff]
    %v107 = vld [vmem:[#allocation5 + $0x50] sm:$0xff]
    %v108 = vld [vmem:[#allocation5 + $0x58] sm:$0xff]
    %v109 = vld [vmem:[#allocation5 + $0x60] sm:$0xff]
    %v110 = vld [vmem:[#allocation5 + $0x68] sm:$0xff]
    %v111 = vld [vmem:[#allocation5 + $0x70] sm:$0xff]
    %v112 = vld [vmem:[#allocation5 + $0x78] sm:$0xff]
    %v113 = vld [vmem:[%s4] sm:$0x1]
    %v115 = vlaneseq
    %v116 = vshrl.u32 %v115, 7
    %v117 = vsub.s32 0, %v116
    %v118 = vrot.slane %v113, %v117
    %120 = vmatprep.subr.mxu0 0.0
    %121 = vmatpush1.msra.mxu0 %v97
    %122 = vmatprep.subr.mxu0 0.0
    %123 = vmatpush1.msra.mxu0 %v98
    %124 = vmatprep.subr.mxu0 0.0
    %125 = vmatpush1.msra.mxu0 %v99
    %126 = vmatprep.subr.mxu0 0.0
    %127 = vmatpush1.msra.mxu0 %v100
    %128 = vmatprep.subr.mxu0 0.0
    %129 = vmatpush1.msra.mxu0 %v101
    %130 = vmatprep.subr.mxu0 0.0
    %131 = vmatpush1.msra.mxu0 %v102
    %132 = vmatprep.subr.mxu0 0.0
    %133 = vmatpush1.msra.mxu0 %v103
    %134 = vmatprep.subr.mxu0 0.0
    %135 = vmatpush1.msra.mxu0 %v104
    %136 = vmatprep.subr.mxu0 0.0
    %137 = vmatpush1.msra.mxu0 %v105
    %138 = vmatprep.subr.mxu0 0.0
    %139 = vmatpush1.msra.mxu0 %v106
    %140 = vmatprep.subr.mxu0 0.0
    %141 = vmatpush1.msra.mxu0 %v107
    %142 = vmatprep.subr.mxu0 0.0
    %143 = vmatpush1.msra.mxu0 %v108
    %144 = vmatprep.subr.mxu0 0.0
    %145 = vmatpush1.msra.mxu0 %v109
    %146 = vmatprep.subr.mxu0 0.0
    %147 = vmatpush1.msra.mxu0 %v110
    %148 = vmatprep.subr.mxu0 0.0
    %149 = vmatpush1.msra.mxu0 %v111
    %150 = vmatprep.subr.mxu0 0.0
    %151 = vmatpush1.msra.mxu0 %v112
    %152 = vmatprep.subr.mxu0 0.0
    %153 = vmatpush1.msra.mxu0 0.0
    %154 = vmatprep.subr.mxu0 0.0
    %155 = vmatpush1.msra.mxu0 0.0
    %156 = vmatprep.subr.mxu0 0.0
    %157 = vmatpush1.msra.mxu0 0.0
    %158 = vmatprep.subr.mxu0 0.0
    %159 = vmatpush1.msra.mxu0 0.0
    %160 = vmatprep.subr.mxu0 0.0
    %161 = vmatpush1.msra.mxu0 0.0
    %162 = vmatprep.subr.mxu0 0.0
    %163 = vmatpush1.msra.mxu0 0.0
    %164 = vmatprep.subr.mxu0 0.0
    %165 = vmatpush1.msra.mxu0 0.0
    %166 = vmatprep.subr.mxu0 0.0
    %167 = vmatpush1.msra.mxu0 0.0
    %168 = vmatprep.subr.mxu0 0.0
    %169 = vmatpush1.msra.mxu0 0.0
    %170 = vmatprep.subr.mxu0 0.0
    %171 = vmatpush1.msra.mxu0 0.0
    %172 = vmatprep.subr.mxu0 0.0
    %173 = vmatpush1.msra.mxu0 0.0
    %174 = vmatprep.subr.mxu0 0.0
    %175 = vmatpush1.msra.mxu0 0.0
    %176 = vmatprep.subr.mxu0 0.0
    %177 = vmatpush1.msra.mxu0 0.0
    %178 = vmatprep.subr.mxu0 0.0
    %179 = vmatpush1.msra.mxu0 0.0
    %180 = vmatprep.subr.mxu0 0.0
    %181 = vmatpush1.msra.mxu0 0.0
    %182 = vmatprep.subr.mxu0 0.0
    %183 = vmatpush1.msra.mxu0 0.0
    %184 = vmatprep.mubr.f32.mxu0 0.0
    %185 = vmatmul.mubr.f32.gmra.mrb[0].mxu0 %v95
    %v186 = vpop.f32.mrb[0].mxu0
    %v187 = vadd.f32 %v118, %v186
    %v188 = vpop.f32.mrb[0].mxu0
    %189 = vmatprep.mubr.f32.mxu0 0.0
    %190 = vmatmul.mubr.f32.gmra.mrb[0].mxu0 %v96
    %v191 = vpop.f32.mrb[0].mxu0
    %v192 = vadd.f32 %v118, %v191
    %v193 = vpop.f32.mrb[0].mxu0
    %194 = vdwg.mxu0
    %195 = vst [vmem:[#allocation7] sm:$0xff] %v187
    %196 = vst [vmem:[#allocation7 + $0x8] sm:$0xff] %v192
    // Predicated region
    $region30: #{tpu_custom_call.1} parent=1 // pred_check
      _
    $region31: #{tpu_custom_call.1} parent=1 // pred_check_branch
      %198 = sbr.rel (0) target = $region33
    $region32: #{tpu_custom_call.1} parent=1 // pred_region
      %s200 = ssub.s32 256, 256
      %201 = vsyncadd [#allocation4], %s200
      %s202 = sshll.u32 [#allocation7], 4
      %s203 = int_to_ptr.vmem [resolvable:$true] %s202
      %208 = dma.vmem_to_hbm [thread:$0]  %s203, 256, %s5, [#allocation4], 128, 128, 8
    $region33: #{tpu_custom_call.1} parent=1 // pred_fallthru
      _
    // Predicated region
    $region34: #{tpu_custom_call.1} parent=1 // pred_check
      _
    $region35: #{tpu_custom_call.1} parent=1 // pred_check_branch
      %210 = sbr.rel (0) target = $region37
    $region36: #{tpu_custom_call.1} parent=1 // pred_region
      %211 = dma.done [#allocation4], 256
    $region37: #{tpu_custom_call.1} parent=1 // pred_fallthru
      _
    %212 = vsyncpa [#allocation3], 1
    %213 = vsyncpa [#allocation6], 1
    %214 = vsyncpa [#allocation4], 1

</llo_original>
